<compile_context>
chip_gen: v7x
topology: tpu7x:2x2x1
jax: 0.10.0
libtpu: 0.0.40
codegen_flags: <defaults>
</compile_context>

<pallas_src>
import functools

import jax
import jax.numpy as jnp
from jax.experimental import pallas as pl
from jax.experimental.pallas import tpu as pltpu

_LANES = 128
_SUBLANES = 8
_TARGET_BLOCK_BYTES = 2 * 1024 * 1024   # per streamed input, per block (f32, lane-padded)
_MAX_BLOCK_ROWS = 4096
_NUM_SPLITS = 2                         # leading "parallel" axis (v7x dual TensorCore)


def _round_up(x, m):
    return ((x + m - 1) // m) * m


# ----------------------------- kernels ---------------------------------------

def _single_block_kernel(p_ref, l_ref, m_ref, is_ref, out_ref, *, squared, inv_total):
    """Whole tensor in one (R, D) block: normalize, diff, reduce, store mean."""
    p = p_ref[...].astype(jnp.float32)
    l = l_ref[...].astype(jnp.float32)
    m = m_ref[...].astype(jnp.float32)       # (1, D) resident row
    inv_s = is_ref[...].astype(jnp.float32)  # (1, D) resident row
    d = p - (l - m) * inv_s
    contrib = d * d if squared else jnp.abs(d)
    out_ref[0, 0] = jnp.sum(contrib) * inv_total


def _tiled_kernel(p_ref, l_ref, m_ref, is_ref, out_ref, acc_ref, *,
                  squared, inv_total, rows_total, block_rows,
                  blocks_per_split, need_mask):
    """Grid-accumulating variant.

    Grid = (splits, blocks_per_split): outer axis is "parallel" (megacore on
    v7x), inner axis accumulates into a small (1, D) VMEM row; the scalar
    finalize store happens once per split on its last inner step.
    """
    i = pl.program_id(1)

    @pl.when(i == 0)
    def _init():
        acc_ref[...] = jnp.zeros_like(acc_ref)

    p = p_ref[...].astype(jnp.float32)
    l = l_ref[...].astype(jnp.float32)
    m = m_ref[...].astype(jnp.float32)       # (1, D) resident row
    inv_s = is_ref[...].astype(jnp.float32)  # (1, D) resident row
    d = p - (l - m) * inv_s
    contrib = d * d if squared else jnp.abs(d)

    if need_mask:
        # Ragged tail / duplicated trailing blocks: mask by LOGICAL global row
        # index (robust whether the out-of-range DMA is clamped or padded).
        c = pl.program_id(0)
        row0 = (c * blocks_per_split + i) * block_rows
        rid = jax.lax.broadcasted_iota(jnp.int32, (block_rows, 1), 0) + row0
        contrib = jnp.where(rid < rows_total, contrib, 0.0)

    # Small resident accumulator: sublane reduce into a (1, D) row instead of
    # read-modify-writing a full-block accumulator each step.
    acc_ref[...] += jnp.sum(contrib, axis=0, keepdims=True)

    @pl.when(i == pl.num_programs(1) - 1)
    def _finalize():
        out_ref[0, 0] = jnp.sum(acc_ref[...]) * inv_total


# --------------------------- fused loss wrapper -------------------------------

def _stats_as_row(x, d):
    """Return x as a (1, d) f32 row if it broadcasts only along the last dim, else None."""
    shp = tuple(x.shape)
    if len(shp) == 0:
        return jnp.broadcast_to(x.astype(jnp.float32).reshape(1, 1), (1, d))
    if any(s != 1 for s in shp[:-1]):
        return None
    last = shp[-1]
    if last not in (1, d):
        return None
    return jnp.broadcast_to(x.astype(jnp.float32).reshape(1, last), (1, d))


@functools.partial(jax.jit, static_argnames=("squared", "block_rows_cap"))
def _fused_normalized_loss(pred, label, mean, std, *, squared, block_rows_cap=None):
    """mean_over_elements( f(pred - (label - mean) / std) ), f = square or abs."""
    label = jnp.broadcast_to(label, pred.shape)

    if pred.ndim == 0:
        pred2d = pred.reshape(1, 1)
        label2d = label.reshape(1, 1)
    else:
        d_last = pred.shape[-1]
        pred2d = pred.reshape(-1, d_last)      # free reshape, no HBM copy
        label2d = label.reshape(-1, d_last)
    R, D = pred2d.shape
    total = R * D
    inv_total = 1.0 / float(total)

    mean_row = _stats_as_row(mean, D)
    std_row = _stats_as_row(std, D)
    if mean_row is None or std_row is None:
        # Stats do not broadcast along the last dim only (rare): pre-normalize
        # the label in JAX and feed identity stats to the kernel.
        label2d = ((label - mean) / std).reshape(R, D)
        mean_row = jnp.zeros((1, D), jnp.float32)
        inv_std_row = jnp.ones((1, D), jnp.float32)
    else:
        inv_std_row = 1.0 / std_row            # exact divide, once, on (1, D)

    # Block sizing: ~_TARGET_BLOCK_BYTES per streamed input per block
    # (sized with the lane-padded width that VMEM actually occupies).
    lanes_pad = _round_up(D, _LANES)
    block_rows = _TARGET_BLOCK_BYTES // (lanes_pad * 4)
    block_rows = max(_SUBLANES,
                     min(_MAX_BLOCK_ROWS, (block_rows // _SUBLANES) * _SUBLANES))
    if block_rows_cap is not None:
        block_rows = max(_SUBLANES,
                         min(block_rows, (block_rows_cap // _SUBLANES) * _SUBLANES))

    if R <= block_rows:
        # Single full-extent (R, D) block: no mask, no accumulator, grid=(1,).
        kernel = functools.partial(_single_block_kernel, squared=squared,
                                   inv_total=inv_total)
        total_out = pl.pallas_call(
            kernel,
            out_shape=jax.ShapeDtypeStruct((1, 1), jnp.float32),
            grid=(1,),
            in_specs=[pl.BlockSpec((R, D), lambda i: (0, 0)),
                      pl.BlockSpec((R, D), lambda i: (0, 0)),
                      pl.BlockSpec((1, D), lambda i: (0, 0)),
                      pl.BlockSpec((1, D), lambda i: (0, 0))],
            out_specs=pl.BlockSpec((1, 1), lambda i: (0, 0),
                                   memory_space=pltpu.SMEM),
            compiler_params=pltpu.CompilerParams(
                dimension_semantics=("arbitrary",)),
        )(pred2d, label2d, mean_row, inv_std_row)
        return jnp.sum(total_out)

    num_blocks = -(-R // block_rows)
    splits = _NUM_SPLITS
    blocks_per_split = -(-num_blocks // splits)
    need_mask = (splits * blocks_per_split * block_rows) != R

    def data_index(c, i):
        # Clamp so duplicated trailing blocks (when splits*bps > num_blocks)
        # re-read the last valid block; their rows are fully masked in-kernel.
        return (jnp.minimum(c * blocks_per_split + i, num_blocks - 1), 0)

    data_spec = pl.BlockSpec((block_rows, D), data_index)
    stat_spec = pl.BlockSpec((1, D), lambda c, i: (0, 0))   # VMEM-resident

    kernel = functools.partial(
        _tiled_kernel, squared=squared, inv_total=inv_total, rows_total=R,
        block_rows=block_rows, blocks_per_split=blocks_per_split,
        need_mask=need_mask)

    partials = pl.pallas_call(
        kernel,
        out_shape=jax.ShapeDtypeStruct((splits, 1), jnp.float32),
        grid=(splits, blocks_per_split),
        in_specs=[data_spec, data_spec, stat_spec, stat_spec],
        out_specs=pl.BlockSpec((1, 1), lambda c, i: (c, 0),
                               memory_space=pltpu.SMEM),
        scratch_shapes=[pltpu.VMEM((1, D), jnp.float32)],
        compiler_params=pltpu.CompilerParams(
            dimension_semantics=("parallel", "arbitrary")),
    )(pred2d, label2d, mean_row, inv_std_row)
    # Per-split partials are already scaled by 1/total; sum gives the mean.
    return jnp.sum(partials)


# ----------------------- loss_single implementations --------------------------

class PallasMSELoss:
    """MSE (mean squared error) over all elements, Pallas-backed."""
    squared = True

    def forward(self, pred, target):
        zero = jnp.zeros((), jnp.float32)
        one = jnp.ones((), jnp.float32)
        return _fused_normalized_loss(pred, target, zero, one, squared=True)

    __call__ = forward


class PallasL1Loss:
    """L1 (mean absolute error) over all elements, Pallas-backed."""
    squared = False

    def forward(self, pred, target):
        zero = jnp.zeros((), jnp.float32)
        one = jnp.ones((), jnp.float32)
        return _fused_normalized_loss(pred, target, zero, one, squared=False)

    __call__ = forward


# ------------------------------ the module ------------------------------------

class LossLabelMeanStdNormalized:
    """Normalize the label by (pose_mean, pose_std) before applying the loss.

    JAX/Pallas port of the PyTorch module; for the Pallas-backed losses above,
    the normalization is fused into the loss-reduction kernel (one pallas_call,
    one pass over HBM, resident mean / 1/std rows).
    """

    def __init__(self, key, loss_single, subjects=False, weight=1):
        self.key = key
        self.loss_single = loss_single
        self.subjects = subjects
        self.weight = weight

    def forward(self, preds, labels):
        pred_pose = preds[self.key]
        label_pose = labels[self.key]
        label_mean = labels['pose_mean']
        label_std = labels['pose_std']

        if self.subjects:
            # TODO(synk): per-subject filtering on labels['frame_info'][:, 3] is
            # data-dependent host-side selection; not implemented in the Pallas path.
            raise NotImplementedError("subjects filtering is not implemented")

        squared = getattr(self.loss_single, "squared", None)
        if squared is not None:
            loss = _fused_normalized_loss(
                pred_pose, label_pose, label_mean, label_std,
                squared=bool(squared))
        else:
            # Generic fallback: normalize in JAX, then apply the user loss.
            label_pose_norm = (label_pose - label_mean) / label_std
            loss = self.loss_single.forward(pred_pose, label_pose_norm)
        return self.weight * loss

    __call__ = forward


# ---------------------------------- demo --------------------------------------

if __name__ == "__main__":
    key = jax.random.PRNGKey(0)
    k0, k1, k2, k3 = jax.random.split(key, 4)

    # Pose regression shapes: batch=2, 16 joints x (x, y, z) = 48 dims.
    batch, pose_dim = 2, 48
    preds = {"pose": jax.random.normal(k0, (batch, pose_dim), dtype=jnp.float32)}
    labels = {
        "pose": jax.random.normal(k1, (batch, pose_dim), dtype=jnp.float32),
        "pose_mean": 0.1 * jax.random.normal(k2, (pose_dim,), dtype=jnp.float32),
        "pose_std": jax.random.uniform(k3, (pose_dim,), dtype=jnp.float32,
                                       minval=0.5, maxval=1.5),
    }

    mse_module = LossLabelMeanStdNormalized(
        key="pose", loss_single=PallasMSELoss(), subjects=False, weight=0.7)
    l1_module = LossLabelMeanStdNormalized(
        key="pose", loss_single=PallasL1Loss(), subjects=False, weight=0.3)

    out_mse = jax.block_until_ready(mse_module(preds, labels))
    out_l1 = jax.block_until_ready(l1_module(preds, labels))

    # Pure-JAX reference check (single-block path).
    label_norm = (labels["pose"] - labels["pose_mean"]) / labels["pose_std"]
    ref_mse = 0.7 * jnp.mean((preds["pose"] - label_norm) ** 2)
    ref_l1 = 0.3 * jnp.mean(jnp.abs(preds["pose"] - label_norm))
    assert jnp.allclose(out_mse, ref_mse, rtol=1e-5, atol=1e-6), (out_mse, ref_mse)
    assert jnp.allclose(out_l1, ref_l1, rtol=1e-5, atol=1e-6), (out_l1, ref_l1)

    # Exercise the tiled / masked / split path with a ragged row count and a
    # tiny forced block size (correctness-only; production sizing is byte-based).
    kb0, kb1 = jax.random.split(k0)
    big_pred = jax.random.normal(kb0, (37, 7, pose_dim), dtype=jnp.float32)   # 259 rows
    big_label = jax.random.normal(kb1, (37, 7, pose_dim), dtype=jnp.float32)
    got = jax.block_until_ready(_fused_normalized_loss(
        big_pred, big_label, labels["pose_mean"], labels["pose_std"],
        squared=True, block_rows_cap=64))
    want = jnp.mean(
        (big_pred - (big_label - labels["pose_mean"]) / labels["pose_std"]) ** 2)
    assert jnp.allclose(got, want, rtol=1e-4, atol=1e-6), (got, want)

    print("KERNEL_OK")
</pallas_src>

<mosaic_0001>
module attributes {stable_mosaic.version = 11 : i64} {
  func.func @_single_block_kernel(%arg0: i32, %arg1: memref<2x48xf32, #tpu.memory_space<vmem>>, %arg2: memref<2x48xf32, #tpu.memory_space<vmem>>, %arg3: memref<1x48xf32, #tpu.memory_space<vmem>>, %arg4: memref<1x48xf32, #tpu.memory_space<vmem>>, %arg5: memref<1x1xf32, #tpu.memory_space<smem>>) attributes {dimension_semantics = [#tpu.dimension_semantics<arbitrary>], iteration_bounds = array<i64: 1>, scalar_prefetch = 0 : i64, scratch_operands = 0 : i64, tpu.core_type = #tpu.core_type<tc>, window_params = [{pipeline_mode = #tpu.pipeline_mode<synchronous>, transform_indices = @transform_0, window_bounds = array<i64: 2, 48>}, {pipeline_mode = #tpu.pipeline_mode<synchronous>, transform_indices = @transform_1, window_bounds = array<i64: 2, 48>}, {pipeline_mode = #tpu.pipeline_mode<synchronous>, transform_indices = @transform_2, window_bounds = array<i64: 1, 48>}, {pipeline_mode = #tpu.pipeline_mode<synchronous>, transform_indices = @transform_3, window_bounds = array<i64: 1, 48>}, {transform_indices = @transform_4, window_bounds = array<i64: 1, 1>}]} {
    %c0 = arith.constant 0 : index
    %c0_0 = arith.constant 0 : index
    %0 = vector.load %arg1[%c0, %c0_0] : memref<2x48xf32, #tpu.memory_space<vmem>>, vector<2x48xf32>
    %c0_1 = arith.constant 0 : index
    %c0_2 = arith.constant 0 : index
    %1 = vector.load %arg2[%c0_1, %c0_2] : memref<2x48xf32, #tpu.memory_space<vmem>>, vector<2x48xf32>
    %c0_3 = arith.constant 0 : index
    %c0_4 = arith.constant 0 : index
    %2 = vector.load %arg3[%c0_3, %c0_4] : memref<1x48xf32, #tpu.memory_space<vmem>>, vector<1x48xf32>
    %c0_5 = arith.constant 0 : index
    %c0_6 = arith.constant 0 : index
    %3 = vector.load %arg4[%c0_5, %c0_6] : memref<1x48xf32, #tpu.memory_space<vmem>>, vector<1x48xf32>
    %4 = vector.broadcast %2 : vector<1x48xf32> to vector<2x48xf32>
    %5 = arith.subf %1, %4 : vector<2x48xf32>
    %6 = vector.broadcast %3 : vector<1x48xf32> to vector<2x48xf32>
    %7 = arith.mulf %5, %6 : vector<2x48xf32>
    %8 = arith.subf %0, %7 : vector<2x48xf32>
    %9 = arith.mulf %8, %8 : vector<2x48xf32>
    %10 = vector.shape_cast %9 : vector<2x48xf32> to vector<1x2x48xf32>
    %cst = arith.constant dense<0.000000e+00> : vector<1xf32>
    %11 = vector.multi_reduction <add>, %10, %cst [1, 2] : vector<1x2x48xf32> to vector<1xf32>
    %12 = vector.shape_cast %11 : vector<1xf32> to vector<1x1x1xf32>
    %13 = vector.extract %12[0, 0, 0] : f32 from vector<1x1x1xf32>
    %cst_7 = arith.constant 0.010416667 : f32
    %14 = arith.mulf %13, %cst_7 : f32
    %c0_8 = arith.constant 0 : index
    %c0_9 = arith.constant 0 : index
    %15 = memref.load %arg5[%c0_8, %c0_9] : memref<1x1xf32, #tpu.memory_space<smem>>
    memref.store %14, %arg5[%c0_8, %c0_9] : memref<1x1xf32, #tpu.memory_space<smem>>
    return
  }
  func.func @transform_0(%arg0: i32) -> (i32, i32) {
    %c0_i32 = arith.constant 0 : i32
    %c0_i32_0 = arith.constant 0 : i32
    %c0_i32_1 = arith.constant 0 : i32
    return %c0_i32, %c0_i32_0 : i32, i32
  }
  func.func @transform_1(%arg0: i32) -> (i32, i32) {
    %c0_i32 = arith.constant 0 : i32
    %c0_i32_0 = arith.constant 0 : i32
    %c0_i32_1 = arith.constant 0 : i32
    return %c0_i32, %c0_i32_0 : i32, i32
  }
  func.func @transform_2(%arg0: i32) -> (i32, i32) {
    %c0_i32 = arith.constant 0 : i32
    %c0_i32_0 = arith.constant 0 : i32
    %c0_i32_1 = arith.constant 0 : i32
    return %c0_i32, %c0_i32_0 : i32, i32
  }
  func.func @transform_3(%arg0: i32) -> (i32, i32) {
    %c0_i32 = arith.constant 0 : i32
    %c0_i32_0 = arith.constant 0 : i32
    %c0_i32_1 = arith.constant 0 : i32
    return %c0_i32, %c0_i32_0 : i32, i32
  }
  func.func @transform_4(%arg0: i32) -> (i32, i32) {
    %c0_i32 = arith.constant 0 : i32
    %c0_i32_0 = arith.constant 0 : i32
    %c0_i32_1 = arith.constant 0 : i32
    return %c0_i32, %c0_i32_0 : i32, i32
  }
}

</mosaic_0001>

<llo_original>
// kernel: _fused_normalized_loss.1
$region0: #{_fused_normalized_loss.1}
  #allocation0 [shape = 'u32[]', space=smem, size = 0x4, offset = 0x4, fixed_abs, tag = 'smem constant byte address 0x4 - core index']
  #allocation1 [shape = 'u32[144,128]{1,0:T(1,128)}', space=vmem, size = 0x12000, scoped, tag = 'internal scratch']
  %s0 = inlined_call_operand.vmem [shape: f32[2,48], index: 0, kind: input, shape index: {}]
  %s1 = inlined_call_operand.vmem [shape: f32[2,48], index: 1, kind: input, shape index: {}]
  %s2 = inlined_call_operand.vmem [shape: f32[1,48], index: 2, kind: input, shape index: {}]
  %s3 = inlined_call_operand.vmem [shape: f32[1,48], index: 3, kind: input, shape index: {}]
  %s4 = inlined_call_operand.hbm [shape: f32[1,1], index: 4, kind: output, shape index: {}]
  %s5 = sld [smem:[#allocation0]]
  $region26: #{_fused_normalized_loss.1} parent=0
    _
  %s7 = ssub.s32 1, %s5
  %s8 = scalar_select 0, %s7, %s5
  $region1: #{_fused_normalized_loss.1} parent=0
    #allocation2 [shape = 'u8[512]{0}', space=smem, size = 0x200, scoped, tag = 'output window, operand 0, single buffered']
    #allocation3 [shape = 's32[1]{0}', space=sflag, size = 0x4, scoped, tag = 'scoped memory for _fused_normalized_loss.1']
    %9 = vsyncpa [#allocation3], 0
    // Predicated region
    $region2: #{_fused_normalized_loss.1} parent=1 // pred_check
      _
    $region3: #{_fused_normalized_loss.1} parent=1 // pred_check_branch
      %11 = sbr.rel (0) target = $region5
    $region4: #{_fused_normalized_loss.1} parent=1 // pred_region
      _
    $region5: #{_fused_normalized_loss.1} parent=1 // pred_fallthru
      _
    // Predicated region
    $region6: #{_fused_normalized_loss.1} parent=1 // pred_check
      _
    $region7: #{_fused_normalized_loss.1} parent=1 // pred_check_branch
      %13 = sbr.rel (0) target = $region9
    $region8: #{_fused_normalized_loss.1} parent=1 // pred_region
      _
    $region9: #{_fused_normalized_loss.1} parent=1 // pred_fallthru
      _
    // Predicated region
    $region10: #{_fused_normalized_loss.1} parent=1 // pred_check
      _
    $region11: #{_fused_normalized_loss.1} parent=1 // pred_check_branch
      %15 = sbr.rel (0) target = $region13
    $region12: #{_fused_normalized_loss.1} parent=1 // pred_region
      _
    $region13: #{_fused_normalized_loss.1} parent=1 // pred_fallthru
      _
    // Predicated region
    $region14: #{_fused_normalized_loss.1} parent=1 // pred_check
      _
    $region15: #{_fused_normalized_loss.1} parent=1 // pred_check_branch
      %17 = sbr.rel (0) target = $region17
    $region16: #{_fused_normalized_loss.1} parent=1 // pred_region
      _
    $region17: #{_fused_normalized_loss.1} parent=1 // pred_fallthru
      _
    %v18 = vld [vmem:[%s0] sm:$0x3]
    %v19 = vld [vmem:[%s1] sm:$0x3]
    %v20 = vld [vmem:[%s2] sm:$0x1]
    %v21 = vld [vmem:[%s3] sm:$0x1]
    %v23 = vlaneseq
    %v24 = vshrl.u32 %v23, 7
    %v25 = vsub.s32 0, %v24
    %v26 = vrot.slane %v20, %v25
    %v28 = vsub.f32 %v19, %v26
    %v30 = vlaneseq
    %v31 = vshrl.u32 %v30, 7
    %v32 = vsub.s32 0, %v31
    %v33 = vrot.slane %v21, %v32
    %v35 = vmul.f32 %v28, %v33
    %v36 = vsub.f32 %v18, %v35
    %v37 = vmul.f32 %v36, %v36
    %vm38 = vcmask 386048
    %v39 = vsel %vm38, %v37, 0.0
    %40 = vadd.xlane.f32.xlu0 %v39
    %v41 = vpop.xlane.xlu0 %40
    %v42 = vrot.slane %v41, 4
    %v43 = vadd.f32 %v41, %v42
    %v44 = vrot.slane %v43, 2
    %v45 = vadd.f32 %v43, %v44
    %v46 = vrot.slane %v45, 1
    %v47 = vadd.f32 %v45, %v46
    %s48 = vtos %v47
    %s49 = smul.f32 %s48, 0.010416667
    %s50 = scalar_lea.smem [#allocation2], 0
    %51 = sst [smem:[%s50]] %s49
    // Predicated region
    $region18: #{_fused_normalized_loss.1} parent=1 // pred_check
      _
    $region19: #{_fused_normalized_loss.1} parent=1 // pred_check_branch
      %53 = sbr.rel (0) target = $region21
    $region20: #{_fused_normalized_loss.1} parent=1 // pred_region
      %s55 = ssub.s32 16, 16
      %56 = vsyncadd [#allocation3], %s55
      %59 = dma.smem_to_hbm [#allocation2], 16, %s4, [#allocation3]
    $region21: #{_fused_normalized_loss.1} parent=1 // pred_fallthru
      _
    // Predicated region
    $region22: #{_fused_normalized_loss.1} parent=1 // pred_check
      _
    $region23: #{_fused_normalized_loss.1} parent=1 // pred_check_branch
      %61 = sbr.rel (0) target = $region25
    $region24: #{_fused_normalized_loss.1} parent=1 // pred_region
      %62 = dma.done [#allocation3], 16
    $region25: #{_fused_normalized_loss.1} parent=1 // pred_fallthru
      _
    %63 = sfence
    %64 = vsyncpa [#allocation3], 1

</llo_original>
